<compile_context>
chip_gen: v7x
topology: tpu7x:2x2x1
jax: 0.10.0
libtpu: 0.0.40
codegen_flags: <defaults>
</compile_context>

<pallas_src>
from itertools import product
import functools

import numpy as np
import jax
import jax.numpy as jnp
from jax.experimental import pallas as pl
from jax.experimental.pallas import tpu as pltpu

N_DIGITS = 10
N_QUERIES = 2 * N_DIGITS - 1          # 19
N_PAD = 24                            # N_QUERIES rounded up to a multiple of 8 sublanes
EPS = 1e-05
_LANE = 128


def build_worlds_queries_matrix(n_digits: int = N_DIGITS) -> jnp.ndarray:
    """Deterministic [n_digits**2, 2*n_digits-1] one-hot sum matrix (reference only)."""
    possible_worlds = list(product(range(n_digits), repeat=2))
    w_q = np.zeros((len(possible_worlds), 2 * n_digits - 1), dtype=np.float32)
    for w, (d1, d2) in enumerate(possible_worlds):
        w_q[w, d1 + d2] = 1.0
    return jnp.asarray(w_q)


def _round_up(x: int, m: int) -> int:
    return ((x + m - 1) // m) * m


def _semantic_loss_kernel(dp_ref, labels_ref, out_ref, *, true_b: int):
    # dp_ref:     [2, N_DIGITS, TB] f32  (digit slot, class on sublanes, batch on lanes)
    # labels_ref: [1, TB] i32
    # out_ref:    [1, TB] f32            (per-sample NLL; padded lanes forced to 0)
    tb = out_ref.shape[1]

    p1 = dp_ref[0]                                                      # [N_DIGITS, TB]
    p2 = dp_ref[1]                                                      # [N_DIGITS, TB]

    # Zero-pad p2 to N_PAD sublanes so sublane rotations wrap zeros back in.
    p2_pad = jnp.concatenate(
        [p2, jnp.zeros((N_PAD - N_DIGITS, tb), jnp.float32)], axis=0)   # [N_PAD, TB]

    # q[s, b] = sum_{i+j=s} p1[i, b] * p2[j, b]
    # (exactly worlds_prob @ wq, since wq is the one-hot "digit sum" matrix).
    # 10 shift-and-FMA steps: pltpu.roll runs on the XLU slot, the multiply-add
    # on the VPU; the MXU is not used at all.
    q = p1[0:1, :] * p2_pad
    for i in range(1, N_DIGITS):
        q = q + p1[i:i + 1, :] * pltpu.roll(p2_pad, shift=i, axis=0)
    # Rows N_QUERIES..N_PAD-1 of q are exactly zero by construction.

    labels = labels_ref[...]                                            # [1, TB] i32
    sub = jax.lax.broadcasted_iota(jnp.int32, (N_PAD, tb), 0)
    picked = jnp.sum(jnp.where(sub == labels, q, 0.0),
                     axis=0, keepdims=True) + EPS                       # [1, TB]
    denom = jnp.sum(q, axis=0, keepdims=True) + N_QUERIES * EPS         # [1, TB]

    # NLL of the normalized query prob, gathered BEFORE the log:
    #   -log((q[label]+eps) / sum_s(q[s]+eps)) = log(denom) - log(picked)
    per_sample = jnp.log(denom) - jnp.log(picked)                       # [1, TB]

    # Mask lanes beyond the true batch (batch was padded to a lane multiple).
    lane = jax.lax.broadcasted_iota(jnp.int32, (1, tb), 1)
    gidx = pl.program_id(0) * tb + lane
    out_ref[...] = jnp.where(gidx < true_b, per_sample, 0.0)


def semantic_loss(digit_probs: jnp.ndarray,
                  sum_labels: jnp.ndarray,
                  *, block_b: int = 8192) -> jnp.ndarray:
    """digit_probs: [B, 2, N_DIGITS] f32, sum_labels: [B] int -> scalar f32 loss."""
    b = digit_probs.shape[0]

    block_b = _round_up(block_b, _LANE)
    tb = min(block_b, _round_up(b, _LANE))     # lane-dense block, multiple of 128
    bp = _round_up(b, tb)                      # padded batch size
    grid = (bp // tb,)

    # Single relayout: batch onto lanes, both digit slots in one input stream.
    dp_t = jnp.transpose(digit_probs.astype(jnp.float32), (1, 2, 0))    # [2, 10, B]
    labels = sum_labels.astype(jnp.int32)
    if bp != b:
        dp_t = jnp.pad(dp_t, ((0, 0), (0, 0), (0, bp - b)))
        labels = jnp.pad(labels, ((0, bp - b),))
    labels_2d = labels.reshape(1, bp)

    per_sample = pl.pallas_call(
        functools.partial(_semantic_loss_kernel, true_b=b),
        out_shape=jax.ShapeDtypeStruct((1, bp), jnp.float32),
        grid=grid,
        in_specs=[
            pl.BlockSpec((2, N_DIGITS, tb), lambda i: (0, 0, i)),
            pl.BlockSpec((1, tb), lambda i: (0, i)),
        ],
        out_specs=pl.BlockSpec((1, tb), lambda i: (0, i)),
        compiler_params=pltpu.CompilerParams(
            dimension_semantics=("parallel",)),
    )(dp_t, labels_2d)

    # Finish the mean in the wrapper: keeps every grid step independent (so it
    # can shard across both v7x TensorCores) and divides by the TRUE batch size.
    return jnp.sum(per_sample) / jnp.float32(b)


def semantic_loss_ref(digit_probs, sum_labels, worlds_queries):
    """Pure-JAX reference mirroring the PyTorch forward exactly."""
    p1 = digit_probs[:, 0]
    p2 = digit_probs[:, 1]
    worlds_prob = (p1[:, :, None] * p2[:, None, :]).reshape(-1, N_DIGITS * N_DIGITS)
    query_prob = worlds_prob @ worlds_queries
    query_prob = query_prob + EPS
    query_prob = query_prob / query_prob.sum(axis=-1, keepdims=True)
    logq = jnp.log(query_prob)
    picked = jnp.take_along_axis(logq, sum_labels[:, None].astype(jnp.int32), axis=1)
    return -jnp.mean(picked)


if __name__ == "__main__":
    key = jax.random.PRNGKey(0)
    k_logits, k_labels = jax.random.split(key)

    B = 8
    logits = jax.random.normal(k_logits, (B, 2, N_DIGITS), dtype=jnp.float32)
    digit_probs = jax.nn.softmax(logits, axis=-1)                 # [B, 2, 10]
    sum_labels = jax.random.randint(k_labels, (B,), 0, N_QUERIES, dtype=jnp.int32)

    wq = build_worlds_queries_matrix(N_DIGITS)                    # [100, 19] (ref only)

    loss = jax.block_until_ready(semantic_loss(digit_probs, sum_labels))
    loss_ref = jax.block_until_ready(semantic_loss_ref(digit_probs, sum_labels, wq))
    assert np.allclose(np.asarray(loss), np.asarray(loss_ref), rtol=1e-5, atol=1e-5), (
        loss, loss_ref)

    print("KERNEL_OK")
</pallas_src>

<mosaic_0001>
module attributes {stable_mosaic.version = 11 : i64} {
  func.func @_semantic_loss_kernel(%arg0: i32, %arg1: memref<2x10x128xf32, #tpu.memory_space<vmem>>, %arg2: memref<1x128xi32, #tpu.memory_space<vmem>>, %arg3: memref<1x128xf32, #tpu.memory_space<vmem>>) attributes {dimension_semantics = [#tpu.dimension_semantics<parallel>], iteration_bounds = array<i64: 1>, scalar_prefetch = 0 : i64, scratch_operands = 0 : i64, tpu.core_type = #tpu.core_type<tc>, window_params = [{transform_indices = @transform_0, window_bounds = array<i64: 2, 10, 128>}, {transform_indices = @transform_1, window_bounds = array<i64: 1, 128>}, {transform_indices = @transform_2, window_bounds = array<i64: 1, 128>}]} {
    %c0 = arith.constant 0 : index
    %c0_0 = arith.constant 0 : index
    %c0_1 = arith.constant 0 : index
    %0 = vector.load %arg1[%c0, %c0_0, %c0_1] : memref<2x10x128xf32, #tpu.memory_space<vmem>>, vector<1x10x128xf32>
    %1 = vector.shape_cast %0 : vector<1x10x128xf32> to vector<10x128xf32>
    %c1 = arith.constant 1 : index
    %c0_2 = arith.constant 0 : index
    %c0_3 = arith.constant 0 : index
    %2 = vector.load %arg1[%c1, %c0_2, %c0_3] : memref<2x10x128xf32, #tpu.memory_space<vmem>>, vector<1x10x128xf32>
    %3 = vector.shape_cast %2 : vector<1x10x128xf32> to vector<10x128xf32>
    %cst = arith.constant 0.000000e+00 : f32
    %4 = vector.broadcast %cst : f32 to vector<14x128xf32>
    %5 = tpu.concatenate %3, %4 in 0 : vector<10x128xf32>, vector<14x128xf32> -> vector<24x128xf32>
    %6 = vector.extract_strided_slice %1 {offsets = [0, 0], sizes = [1, 128], strides = [1, 1]} : vector<10x128xf32> to vector<1x128xf32>
    %7 = vector.broadcast %6 : vector<1x128xf32> to vector<24x128xf32>
    %8 = arith.mulf %7, %5 : vector<24x128xf32>
    %9 = vector.extract_strided_slice %1 {offsets = [1, 0], sizes = [1, 128], strides = [1, 1]} : vector<10x128xf32> to vector<1x128xf32>
    %c1_i32 = arith.constant 1 : i32
    %10 = tpu.dynamic_rotate %5 by %c1_i32 dim 0 : vector<24x128xf32>, i32 -> vector<24x128xf32>
    %11 = vector.broadcast %9 : vector<1x128xf32> to vector<24x128xf32>
    %12 = arith.mulf %11, %10 : vector<24x128xf32>
    %13 = arith.addf %8, %12 : vector<24x128xf32>
    %14 = vector.extract_strided_slice %1 {offsets = [2, 0], sizes = [1, 128], strides = [1, 1]} : vector<10x128xf32> to vector<1x128xf32>
    %c2_i32 = arith.constant 2 : i32
    %15 = tpu.dynamic_rotate %5 by %c2_i32 dim 0 : vector<24x128xf32>, i32 -> vector<24x128xf32>
    %16 = vector.broadcast %14 : vector<1x128xf32> to vector<24x128xf32>
    %17 = arith.mulf %16, %15 : vector<24x128xf32>
    %18 = arith.addf %13, %17 : vector<24x128xf32>
    %19 = vector.extract_strided_slice %1 {offsets = [3, 0], sizes = [1, 128], strides = [1, 1]} : vector<10x128xf32> to vector<1x128xf32>
    %c3_i32 = arith.constant 3 : i32
    %20 = tpu.dynamic_rotate %5 by %c3_i32 dim 0 : vector<24x128xf32>, i32 -> vector<24x128xf32>
    %21 = vector.broadcast %19 : vector<1x128xf32> to vector<24x128xf32>
    %22 = arith.mulf %21, %20 : vector<24x128xf32>
    %23 = arith.addf %18, %22 : vector<24x128xf32>
    %24 = vector.extract_strided_slice %1 {offsets = [4, 0], sizes = [1, 128], strides = [1, 1]} : vector<10x128xf32> to vector<1x128xf32>
    %c4_i32 = arith.constant 4 : i32
    %25 = tpu.dynamic_rotate %5 by %c4_i32 dim 0 : vector<24x128xf32>, i32 -> vector<24x128xf32>
    %26 = vector.broadcast %24 : vector<1x128xf32> to vector<24x128xf32>
    %27 = arith.mulf %26, %25 : vector<24x128xf32>
    %28 = arith.addf %23, %27 : vector<24x128xf32>
    %29 = vector.extract_strided_slice %1 {offsets = [5, 0], sizes = [1, 128], strides = [1, 1]} : vector<10x128xf32> to vector<1x128xf32>
    %c5_i32 = arith.constant 5 : i32
    %30 = tpu.dynamic_rotate %5 by %c5_i32 dim 0 : vector<24x128xf32>, i32 -> vector<24x128xf32>
    %31 = vector.broadcast %29 : vector<1x128xf32> to vector<24x128xf32>
    %32 = arith.mulf %31, %30 : vector<24x128xf32>
    %33 = arith.addf %28, %32 : vector<24x128xf32>
    %34 = vector.extract_strided_slice %1 {offsets = [6, 0], sizes = [1, 128], strides = [1, 1]} : vector<10x128xf32> to vector<1x128xf32>
    %c6_i32 = arith.constant 6 : i32
    %35 = tpu.dynamic_rotate %5 by %c6_i32 dim 0 : vector<24x128xf32>, i32 -> vector<24x128xf32>
    %36 = vector.broadcast %34 : vector<1x128xf32> to vector<24x128xf32>
    %37 = arith.mulf %36, %35 : vector<24x128xf32>
    %38 = arith.addf %33, %37 : vector<24x128xf32>
    %39 = vector.extract_strided_slice %1 {offsets = [7, 0], sizes = [1, 128], strides = [1, 1]} : vector<10x128xf32> to vector<1x128xf32>
    %c7_i32 = arith.constant 7 : i32
    %40 = tpu.dynamic_rotate %5 by %c7_i32 dim 0 : vector<24x128xf32>, i32 -> vector<24x128xf32>
    %41 = vector.broadcast %39 : vector<1x128xf32> to vector<24x128xf32>
    %42 = arith.mulf %41, %40 : vector<24x128xf32>
    %43 = arith.addf %38, %42 : vector<24x128xf32>
    %44 = vector.extract_strided_slice %1 {offsets = [8, 0], sizes = [1, 128], strides = [1, 1]} : vector<10x128xf32> to vector<1x128xf32>
    %c8_i32 = arith.constant 8 : i32
    %45 = tpu.dynamic_rotate %5 by %c8_i32 dim 0 : vector<24x128xf32>, i32 -> vector<24x128xf32>
    %46 = vector.broadcast %44 : vector<1x128xf32> to vector<24x128xf32>
    %47 = arith.mulf %46, %45 : vector<24x128xf32>
    %48 = arith.addf %43, %47 : vector<24x128xf32>
    %49 = vector.extract_strided_slice %1 {offsets = [9, 0], sizes = [1, 128], strides = [1, 1]} : vector<10x128xf32> to vector<1x128xf32>
    %c9_i32 = arith.constant 9 : i32
    %50 = tpu.dynamic_rotate %5 by %c9_i32 dim 0 : vector<24x128xf32>, i32 -> vector<24x128xf32>
    %51 = vector.broadcast %49 : vector<1x128xf32> to vector<24x128xf32>
    %52 = arith.mulf %51, %50 : vector<24x128xf32>
    %53 = arith.addf %48, %52 : vector<24x128xf32>
    %c0_4 = arith.constant 0 : index
    %c0_5 = arith.constant 0 : index
    %54 = vector.load %arg2[%c0_4, %c0_5] : memref<1x128xi32, #tpu.memory_space<vmem>>, vector<1x128xi32>
    %55 = tpu.iota {dimensions = array<i32: 0>} : vector<24x128xi32>
    %56 = vector.broadcast %54 : vector<1x128xi32> to vector<24x128xi32>
    %57 = arith.cmpi eq, %55, %56 : vector<24x128xi32>
    %cst_6 = arith.constant 0.000000e+00 : f32
    %58 = vector.broadcast %cst_6 : f32 to vector<24x128xf32>
    %59 = arith.select %57, %53, %58 : vector<24x128xi1>, vector<24x128xf32>
    %cst_7 = arith.constant dense<0.000000e+00> : vector<128xf32>
    %60 = vector.multi_reduction <add>, %59, %cst_7 [0] : vector<24x128xf32> to vector<128xf32>
    %61 = vector.shape_cast %60 : vector<128xf32> to vector<1x128xf32>
    %cst_8 = arith.constant 9.99999974E-6 : f32
    %62 = vector.broadcast %cst_8 : f32 to vector<1x128xf32>
    %63 = arith.addf %61, %62 : vector<1x128xf32>
    %cst_9 = arith.constant dense<0.000000e+00> : vector<128xf32>
    %64 = vector.multi_reduction <add>, %53, %cst_9 [0] : vector<24x128xf32> to vector<128xf32>
    %65 = vector.shape_cast %64 : vector<128xf32> to vector<1x128xf32>
    %cst_10 = arith.constant 1.900000e-04 : f32
    %66 = vector.broadcast %cst_10 : f32 to vector<1x128xf32>
    %67 = arith.addf %65, %66 : vector<1x128xf32>
    %68 = math.log %67 : vector<1x128xf32>
    %69 = math.log %63 : vector<1x128xf32>
    %70 = arith.subf %68, %69 : vector<1x128xf32>
    %71 = tpu.iota {dimensions = array<i32: 1>} : vector<1x128xi32>
    %c128_i32 = arith.constant 128 : i32
    %72 = arith.muli %arg0, %c128_i32 : i32
    %73 = vector.broadcast %72 : i32 to vector<1x128xi32>
    %74 = arith.addi %73, %71 : vector<1x128xi32>
    %c8_i32_11 = arith.constant 8 : i32
    %75 = vector.broadcast %c8_i32_11 : i32 to vector<1x128xi32>
    %76 = arith.cmpi slt, %74, %75 : vector<1x128xi32>
    %cst_12 = arith.constant 0.000000e+00 : f32
    %77 = vector.broadcast %cst_12 : f32 to vector<1x128xf32>
    %78 = arith.select %76, %70, %77 : vector<1x128xi1>, vector<1x128xf32>
    %c0_13 = arith.constant 0 : index
    %c0_14 = arith.constant 0 : index
    %79 = vector.load %arg3[%c0_13, %c0_14] : memref<1x128xf32, #tpu.memory_space<vmem>>, vector<1x128xf32>
    tpu.vector_store %arg3[%c0_13, %c0_14], %78 {strides = array<i32>} : memref<1x128xf32, #tpu.memory_space<vmem>>, vector<1x128xf32>,
    return
  }
  func.func @transform_0(%arg0: i32) -> (i32, i32, i32) {
    %c0_i32 = arith.constant 0 : i32
    %c0_i32_0 = arith.constant 0 : i32
    %c0_i32_1 = arith.constant 0 : i32
    return %c0_i32, %c0_i32_0, %arg0 : i32, i32, i32
  }
  func.func @transform_1(%arg0: i32) -> (i32, i32) {
    %c0_i32 = arith.constant 0 : i32
    %c0_i32_0 = arith.constant 0 : i32
    return %c0_i32, %arg0 : i32, i32
  }
  func.func @transform_2(%arg0: i32) -> (i32, i32) {
    %c0_i32 = arith.constant 0 : i32
    %c0_i32_0 = arith.constant 0 : i32
    return %c0_i32, %arg0 : i32, i32
  }
}

</mosaic_0001>

<llo_original>
// kernel: tpu_custom_call.1
$region0: #{tpu_custom_call.1}
  #allocation0 [shape = 'u32[]', space=smem, size = 0x4, offset = 0x4, fixed_abs, tag = 'smem constant byte address 0x4 - core index']
  #allocation1 [shape = 'u32[144,128]{1,0:T(1,128)}', space=vmem, size = 0x12000, scoped, tag = 'internal scratch']
  %s0 = inlined_call_operand.vmem [shape: f32[2,10,128], index: 0, kind: input, shape index: {}]
  %s1 = inlined_call_operand.vmem [shape: s32[1,128], index: 1, kind: input, shape index: {}]
  %s2 = inlined_call_operand.hbm [shape: f32[1,128], index: 2, kind: output, shape index: {}]
  %s3 = sld [smem:[#allocation0]]
  $region18: #{tpu_custom_call.1} parent=0
    _
  %s5 = ssub.s32 1, %s3
  %s6 = scalar_select 0, %s5, %s3
  $region1: #{tpu_custom_call.1} parent=0
    #allocation2 [shape = 'u8[512]{0}', space=vmem, size = 0x400, scoped, tag = 'output window, operand 0, single buffered']
    #allocation3 [shape = 's32[1]{0}', space=sflag, size = 0x4, scoped, tag = 'scoped memory for tpu_custom_call.1']
    %7 = vsyncpa [#allocation3], 0
    // Predicated region
    $region2: #{tpu_custom_call.1} parent=1 // pred_check
      _
    $region3: #{tpu_custom_call.1} parent=1 // pred_check_branch
      %9 = sbr.rel (0) target = $region5
    $region4: #{tpu_custom_call.1} parent=1 // pred_region
      _
    $region5: #{tpu_custom_call.1} parent=1 // pred_fallthru
      _
    // Predicated region
    $region6: #{tpu_custom_call.1} parent=1 // pred_check
      _
    $region7: #{tpu_custom_call.1} parent=1 // pred_check_branch
      %11 = sbr.rel (0) target = $region9
    $region8: #{tpu_custom_call.1} parent=1 // pred_region
      _
    $region9: #{tpu_custom_call.1} parent=1 // pred_fallthru
      _
    %v12 = vld [vmem:[%s0] sm:$0xff]
    %v13 = vld [vmem:[%s0 + $0x8] sm:$0x3]
    %s14 = scalar_lea.vmem %s0, 16
    %v15 = vld [vmem:[%s14] sm:$0xff]
    %v16 = vld [vmem:[%s14 + $0x8] sm:$0x3]
    %vm17 = vcmask 1041408
    %v18 = vsel %vm17, %v16, 0.0
    %v19 = vlaneseq
    %v20 = vshrl.u32 %v19, 7
    %v21 = vsub.s32 0, %v20
    %v22 = vrot.slane %v12, %v21
    %v23 = vmul.f32 %v22, %v15
    %v24 = vmul.f32 %v22, %v18
    %v25 = vmul.f32 %v22, 0.0
    %v26 = vrot.slane %v15, 7
    %v27 = vrot.slane %v18, 7
    %v28 = vlaneseq
    %v29 = vshrl.u32 %v28, 7
    %vm30 = vcmp.lt.s32.totalorder %v29, 1
    %v31 = vsel %vm30, %v27, 0.0
    %v32 = vsel %vm30, %v26, %v27
    %v33 = vsel %vm30, 0.0, %v26
    %v34 = vlaneseq
    %v35 = vshrl.u32 %v34, 7
    %v36 = vsub.s32 1, %v35
    %v37 = vrot.slane %v12, %v36
    %v38 = vmul.f32 %v37, %v33
    %v39 = vmul.f32 %v37, %v32
    %v40 = vmul.f32 %v37, %v31
    %v41 = vadd.f32 %v23, %v38
    %v42 = vadd.f32 %v24, %v39
    %v43 = vadd.f32 %v25, %v40
    %v44 = vrot.slane %v15, 6
    %v45 = vrot.slane %v18, 6
    %vm46 = vcmp.lt.s32.totalorder %v29, 2
    %v47 = vsel %vm46, %v45, 0.0
    %v48 = vsel %vm46, %v44, %v45
    %v49 = vsel %vm46, 0.0, %v44
    %v50 = vlaneseq
    %v51 = vshrl.u32 %v50, 7
    %v52 = vsub.s32 2, %v51
    %v53 = vrot.slane %v12, %v52
    %v54 = vmul.f32 %v53, %v49
    %v55 = vmul.f32 %v53, %v48
    %v56 = vmul.f32 %v53, %v47
    %v57 = vadd.f32 %v41, %v54
    %v58 = vadd.f32 %v42, %v55
    %v59 = vadd.f32 %v43, %v56
    %v60 = vrot.slane %v15, 5
    %v61 = vrot.slane %v18, 5
    %vm62 = vcmp.lt.s32.totalorder %v29, 3
    %v63 = vsel %vm62, %v61, 0.0
    %v64 = vsel %vm62, %v60, %v61
    %v65 = vsel %vm62, 0.0, %v60
    %v66 = vlaneseq
    %v67 = vshrl.u32 %v66, 7
    %v68 = vsub.s32 3, %v67
    %v69 = vrot.slane %v12, %v68
    %v70 = vmul.f32 %v69, %v65
    %v71 = vmul.f32 %v69, %v64
    %v72 = vmul.f32 %v69, %v63
    %v73 = vadd.f32 %v57, %v70
    %v74 = vadd.f32 %v58, %v71
    %v75 = vadd.f32 %v59, %v72
    %v76 = vrot.slane %v15, 4
    %v77 = vrot.slane %v18, 4
    %vm78 = vcmp.lt.s32.totalorder %v29, 4
    %v79 = vsel %vm78, %v77, 0.0
    %v80 = vsel %vm78, %v76, %v77
    %v81 = vsel %vm78, 0.0, %v76
    %v82 = vlaneseq
    %v83 = vshrl.u32 %v82, 7
    %v84 = vsub.s32 4, %v83
    %v85 = vrot.slane %v12, %v84
    %v86 = vmul.f32 %v85, %v81
    %v87 = vmul.f32 %v85, %v80
    %v88 = vmul.f32 %v85, %v79
    %v89 = vadd.f32 %v73, %v86
    %v90 = vadd.f32 %v74, %v87
    %v91 = vadd.f32 %v75, %v88
    %v92 = vrot.slane %v15, 3
    %v93 = vrot.slane %v18, 3
    %vm94 = vcmp.lt.s32.totalorder %v29, 5
    %v95 = vsel %vm94, %v93, 0.0
    %v96 = vsel %vm94, %v92, %v93
    %v97 = vsel %vm94, 0.0, %v92
    %v98 = vlaneseq
    %v99 = vshrl.u32 %v98, 7
    %v100 = vsub.s32 5, %v99
    %v101 = vrot.slane %v12, %v100
    %v102 = vmul.f32 %v101, %v97
    %v103 = vmul.f32 %v101, %v96
    %v104 = vmul.f32 %v101, %v95
    %v105 = vadd.f32 %v89, %v102
    %v106 = vadd.f32 %v90, %v103
    %v107 = vadd.f32 %v91, %v104
    %v108 = vrot.slane %v15, 2
    %v109 = vrot.slane %v18, 2
    %vm110 = vcmp.lt.s32.totalorder %v29, 6
    %v111 = vsel %vm110, %v109, 0.0
    %v112 = vsel %vm110, %v108, %v109
    %v113 = vsel %vm110, 0.0, %v108
    %v114 = vlaneseq
    %v115 = vshrl.u32 %v114, 7
    %v116 = vsub.s32 6, %v115
    %v117 = vrot.slane %v12, %v116
    %v118 = vmul.f32 %v117, %v113
    %v119 = vmul.f32 %v117, %v112
    %v120 = vmul.f32 %v117, %v111
    %v121 = vadd.f32 %v105, %v118
    %v122 = vadd.f32 %v106, %v119
    %v123 = vadd.f32 %v107, %v120
    %v124 = vrot.slane %v15, 1
    %v125 = vrot.slane %v18, 1
    %vm126 = vcmp.lt.s32.totalorder %v29, 7
    %v127 = vsel %vm126, %v125, 0.0
    %v128 = vsel %vm126, %v124, %v125
    %v129 = vsel %vm126, 0.0, %v124
    %v130 = vlaneseq
    %v131 = vshrl.u32 %v130, 7
    %v132 = vsub.s32 7, %v131
    %v133 = vrot.slane %v12, %v132
    %v134 = vmul.f32 %v133, %v129
    %v135 = vmul.f32 %v133, %v128
    %v136 = vmul.f32 %v133, %v127
    %v137 = vadd.f32 %v121, %v134
    %v138 = vadd.f32 %v122, %v135
    %v139 = vadd.f32 %v123, %v136
    %v140 = vlaneseq
    %v141 = vshrl.u32 %v140, 7
    %v142 = vsub.s32 0, %v141
    %v143 = vrot.slane %v13, %v142
    %v144 = vmul.f32 %v143, 0.0
    %v145 = vmul.f32 %v143, %v15
    %v146 = vmul.f32 %v143, %v18
    %v147 = vadd.f32 %v137, %v144
    %v148 = vadd.f32 %v138, %v145
    %v149 = vadd.f32 %v139, %v146
    %v150 = vlaneseq
    %v151 = vshrl.u32 %v150, 7
    %v152 = vsub.s32 1, %v151
    %v153 = vrot.slane %v13, %v152
    %v154 = vmul.f32 %v153, %v31
    %v155 = vmul.f32 %v153, %v33
    %v156 = vmul.f32 %v153, %v32
    %v157 = vadd.f32 %v147, %v154
    %v158 = vadd.f32 %v148, %v155
    %v159 = vadd.f32 %v149, %v156
    %v160 = vld [vmem:[%s1] sm:$0x1]
    %v161 = vadd.s32 %v29, 8
    %v162 = vadd.s32 %v29, 16
    %v163 = vlaneseq
    %v164 = vshrl.u32 %v163, 7
    %v165 = vsub.s32 0, %v164
    %v166 = vrot.slane %v160, %v165
    %vm167 = vcmp.eq.s32.totalorder %v29, %v166
    %vm168 = vcmp.eq.s32.totalorder %v161, %v166
    %vm169 = vcmp.eq.s32.totalorder %v162, %v166
    %v170 = vsel %vm167, %v157, 0.0
    %v171 = vsel %vm168, %v158, 0.0
    %v172 = vsel %vm169, %v159, 0.0
    %v173 = vadd.f32 %v170, %v171
    %v174 = vadd.f32 %v173, %v172
    %v175 = vrot.slane %v174, 4
    %v176 = vadd.f32 %v174, %v175
    %v177 = vrot.slane %v176, 2
    %v178 = vadd.f32 %v176, %v177
    %v179 = vrot.slane %v178, 1
    %v180 = vadd.f32 %v178, %v179
    %v181 = vadd.f32 %v180, 1e-05
    %v182 = vadd.f32 %v157, %v158
    %v183 = vadd.f32 %v182, %v159
    %v184 = vrot.slane %v183, 4
    %v185 = vadd.f32 %v183, %v184
    %v186 = vrot.slane %v185, 2
    %v187 = vadd.f32 %v185, %v186
    %v188 = vrot.slane %v187, 1
    %v189 = vadd.f32 %v187, %v188
    %v190 = vadd.f32 %v189, 0.00019
    %v191 = vlog2.pop %v190
    %v192 = vmul.f32 %v191, 0.6931472
    %v193 = vlog2.pop %v181
    %v194 = vmul.f32 %v193, 0.6931472
    %v195 = vsub.f32 %v192, %v194
    %v196 = vlaneseq
    %v197 = vand.u32 %v196, 127
    %s198 = smul.u32 0, 128
    %v199 = vstv %s198
    %v200 = vadd.s32 %v199, %v197
    %vm201 = vcmp.lt.s32.totalorder %v200, 8
    %v202 = vsel %vm201, %v195, 0.0
    %203 = vst [vmem:[#allocation2] sm:$0x1] %v202
    // Predicated region
    $region10: #{tpu_custom_call.1} parent=1 // pred_check
      _
    $region11: #{tpu_custom_call.1} parent=1 // pred_check_branch
      %205 = sbr.rel (0) target = $region13
    $region12: #{tpu_custom_call.1} parent=1 // pred_region
      %s207 = ssub.s32 16, 16
      %208 = vsyncadd [#allocation3], %s207
      %s210 = sshll.u32 [#allocation2], 4
      %s211 = int_to_ptr.vmem [resolvable:$true] %s210
      %213 = dma.vmem_to_hbm [thread:$0]  %s211, 16, %s2, [#allocation3]
    $region13: #{tpu_custom_call.1} parent=1 // pred_fallthru
      _
    // Predicated region
    $region14: #{tpu_custom_call.1} parent=1 // pred_check
      _
    $region15: #{tpu_custom_call.1} parent=1 // pred_check_branch
      %215 = sbr.rel (0) target = $region17
    $region16: #{tpu_custom_call.1} parent=1 // pred_region
      %216 = dma.done [#allocation3], 16
    $region17: #{tpu_custom_call.1} parent=1 // pred_fallthru
      _
    %217 = vsyncpa [#allocation3], 1

</llo_original>
